<compile_context>
chip_gen: v7x
topology: tpu7x:2x2x1
jax: 0.10.0
libtpu: 0.0.40
codegen_flags: <defaults>
</compile_context>

<pallas_src>
import functools
import math

import numpy as np
import jax
import jax.numpy as jnp
from jax.experimental import pallas as pl
from jax.experimental.pallas import tpu as pltpu


def _round_up(a, b):
    return -(-a // b) * b


def _quant_kernel(x_ref, e_ref, out_ref, *, step):
    # x_ref  : (tb, tf)     f32 input tile
    # e_ref  : (tf, tf*B)   bf16 scaled one-hot (block-diagonal) expansion block
    # out_ref: (tb, tf*B)   bits in {0, 1}, lane-dense
    q = jnp.round(x_ref[...] * step - 0.5)          # integer-valued f32 levels in [0, 2**B]
    # TODO(synk): torch's float->uint8 cast of NEGATIVE values is implementation-defined
    # and is not reproduced; inputs here are post-sigmoid in [0, 1], for which the uint8
    # wrap is a no-op on the B <= 8 low-order bits extracted below.
    qe = jnp.dot(q.astype(jnp.bfloat16), e_ref[...],
                 preferred_element_type=jnp.float32)    # (tb, tf*B); exact for B <= 8
    out_ref[...] = (jnp.floor(qe).astype(jnp.int32) & 1).astype(out_ref.dtype)


def quantization_pallas(x, B, *, out_dtype=jnp.float32, tile_rows=512):
    """Forward of QuantizationLayer(B): x (batch, feat) -> bits (batch, feat*B)."""
    assert x.ndim == 2, "QuantizationLayer expects a 2-D (batch, features) input"
    assert 1 <= B <= 8, "uint8 semantics / exact bf16 expansion require B <= 8"
    x = x.astype(jnp.float32)
    batch, feat = x.shape
    nb = feat * B
    step = float(2 ** B)
    out_itemsize = jnp.dtype(out_dtype).itemsize

    # ---- feature tile tf: one (tf, tf*B) diagonal block of E is reused for all tiles.
    if feat <= 512:
        if (feat * B) % 128 == 0:
            tf = feat
        else:
            lane_f = 128 // math.gcd(128, B)       # features per 128 output lanes
            tf = _round_up(feat, lane_f)           # pad so stores stay lane-dense
        feat_p = tf                                # single feature tile
    else:
        tf = 256                                   # matches MXU K width on v6e/v7x
        feat_p = _round_up(feat, tf)
    n_ft = feat_p // tf

    if feat_p != feat:
        # Zero-padded features quantize to all-zero bits; their columns are sliced off.
        x = jnp.pad(x, ((0, 0), (0, feat_p - feat)))

    # ---- batch tile tb: multiple of 8 sublanes, budgeted for <= ~14 MiB of VMEM.
    budget = 14 * 1024 * 1024
    e_bytes = 2 * tf * (tf * B) * 2                          # double-buffered bf16 E block
    row_bytes = tf * 4 + tf * B * out_itemsize               # one x row + one out row
    max_tb = max(8, ((budget - e_bytes) // (2 * row_bytes)) // 8 * 8)
    if batch <= 8:
        tb = batch                                           # single full-batch block
    else:
        tb = min(tile_rows, max_tb, _round_up(batch, 8))
        if -(-batch // tb) == 1:
            # ensure >= 2 grid steps so both v7x TensorCores get work
            tb = max(8, _round_up(-(-batch // 2), 8))
    n_bt = -(-batch // tb)                                   # ragged last block handled by Pallas

    # ---- constant scaled one-hot diagonal block E: (tf, tf*B), bf16 (exact powers of 2).
    cols = np.arange(tf * B)
    e_np = np.zeros((tf, tf * B), np.float32)
    e_np[cols // B, cols] = 2.0 ** (-(B - 1 - (cols % B)))
    e = jnp.asarray(e_np, dtype=jnp.bfloat16)

    cost = pl.CostEstimate(
        flops=int(2 * n_bt * tb * n_ft * tf * (tf * B)),
        transcendentals=0,
        bytes_accessed=int(batch * feat_p * 4
                           + batch * feat_p * B * out_itemsize
                           + tf * tf * B * 2),
    )

    out = pl.pallas_call(
        functools.partial(_quant_kernel, step=step),
        out_shape=jax.ShapeDtypeStruct((batch, feat_p * B), out_dtype),
        grid_spec=pltpu.PrefetchScalarGridSpec(
            num_scalar_prefetch=0,
            grid=(n_bt, n_ft),
            in_specs=[
                pl.BlockSpec((tb, tf), lambda i, f: (i, f)),       # x tile
                pl.BlockSpec((tf, tf * B), lambda i, f: (0, 0)),   # resident diagonal E block
            ],
            out_specs=pl.BlockSpec((tb, tf * B), lambda i, f: (i, f)),
        ),
        compiler_params=pltpu.CompilerParams(
            dimension_semantics=("parallel", "parallel")),
        cost_estimate=cost,
    )(x, e)

    if feat_p != feat:
        out = out[:, :nb]
    return out


def ref_quantization(x, B):
    """Faithful pure-JAX translation of Quantization.forward / Num2Bit."""
    step = 2 ** B
    q = jnp.round(x * step - 0.5).astype(jnp.int32) % 256        # uint8 cast
    exps = jnp.arange(2 * B - 1, -1, -1, dtype=jnp.int32)        # 2B bits, MSB first
    bits = (q[:, :, None] // (2 ** exps)[None, None, :]) % 2
    bits = bits[:, :, B:].reshape(x.shape[0], x.shape[1] * B)    # keep low B bits
    return bits.astype(jnp.float32)


if __name__ == "__main__":
    key = jax.random.PRNGKey(0)
    batch, feat, B = 2, 32, 4                     # output width = feat*B = 128 lanes
    # Quantizer input lies in [0, 1] in the original model (post-sigmoid encoder).
    x = jax.random.uniform(key, (batch, feat), jnp.float32)

    out = jax.block_until_ready(quantization_pallas(x, B))
    ref = jax.block_until_ready(ref_quantization(x, B))

    assert out.shape == (batch, feat * B)
    np.testing.assert_allclose(np.asarray(out), np.asarray(ref), rtol=0, atol=1e-6)
    print("KERNEL_OK")
</pallas_src>

<mosaic_0001>
module attributes {stable_mosaic.version = 11 : i64} {
  func.func @_quant_kernel(%arg0: i32, %arg1: i32, %arg2: memref<2x32xf32, #tpu.memory_space<vmem>>, %arg3: memref<32x128xbf16, #tpu.memory_space<vmem>>, %arg4: memref<2x128xf32, #tpu.memory_space<vmem>>) attributes {dimension_semantics = [#tpu.dimension_semantics<parallel>, #tpu.dimension_semantics<parallel>], iteration_bounds = array<i64: 1, 1>, scalar_prefetch = 0 : i64, scratch_operands = 0 : i64, tpu.core_type = #tpu.core_type<tc>, window_params = [{transform_indices = @transform_0, window_bounds = array<i64: 2, 32>}, {pipeline_mode = #tpu.pipeline_mode<synchronous>, transform_indices = @transform_1, window_bounds = array<i64: 32, 128>}, {transform_indices = @transform_2, window_bounds = array<i64: 2, 128>}]} {
    %c0 = arith.constant 0 : index
    %c0_0 = arith.constant 0 : index
    %0 = vector.load %arg2[%c0, %c0_0] : memref<2x32xf32, #tpu.memory_space<vmem>>, vector<2x32xf32>
    %cst = arith.constant 1.600000e+01 : f32
    %1 = vector.broadcast %cst : f32 to vector<2x32xf32>
    %2 = arith.mulf %0, %1 : vector<2x32xf32>
    %cst_1 = arith.constant 5.000000e-01 : f32
    %3 = vector.broadcast %cst_1 : f32 to vector<2x32xf32>
    %4 = arith.subf %2, %3 : vector<2x32xf32>
    %5 = math.roundeven %4 : vector<2x32xf32>
    %6 = arith.truncf %5 : vector<2x32xf32> to vector<2x32xbf16>
    %c0_2 = arith.constant 0 : index
    %c0_3 = arith.constant 0 : index
    %7 = vector.load %arg3[%c0_2, %c0_3] : memref<32x128xbf16, #tpu.memory_space<vmem>>, vector<32x128xbf16>
    %cst_4 = arith.constant dense<0.000000e+00> : vector<2x128xf32>
    %8 = tpu.matmul %6, %7, %cst_4 {dimension_numbers = #tpu.dot_dimension_numbers<[1], [0], [0], [1], [0, 0, 1, 1], [], []>} : vector<2x32xbf16>, vector<32x128xbf16>, vector<2x128xf32> -> vector<2x128xf32>
    %9 = math.floor %8 : vector<2x128xf32>
    %10 = arith.fptosi %9 : vector<2x128xf32> to vector<2x128xi32>
    %c1_i32 = arith.constant 1 : i32
    %11 = vector.broadcast %c1_i32 : i32 to vector<2x128xi32>
    %12 = arith.andi %10, %11 : vector<2x128xi32>
    %13 = arith.sitofp %12 : vector<2x128xi32> to vector<2x128xf32>
    %c0_5 = arith.constant 0 : index
    %c0_6 = arith.constant 0 : index
    %14 = vector.load %arg4[%c0_5, %c0_6] : memref<2x128xf32, #tpu.memory_space<vmem>>, vector<2x128xf32>
    tpu.vector_store %arg4[%c0_5, %c0_6], %13 {strides = array<i32>} : memref<2x128xf32, #tpu.memory_space<vmem>>, vector<2x128xf32>,
    return
  }
  func.func @transform_0(%arg0: i32, %arg1: i32) -> (i32, i32) {
    %c0_i32 = arith.constant 0 : i32
    return %arg0, %arg1 : i32, i32
  }
  func.func @transform_1(%arg0: i32, %arg1: i32) -> (i32, i32) {
    %c0_i32 = arith.constant 0 : i32
    %c0_i32_0 = arith.constant 0 : i32
    %c0_i32_1 = arith.constant 0 : i32
    return %c0_i32, %c0_i32_0 : i32, i32
  }
  func.func @transform_2(%arg0: i32, %arg1: i32) -> (i32, i32) {
    %c0_i32 = arith.constant 0 : i32
    return %arg0, %arg1 : i32, i32
  }
}

</mosaic_0001>

<llo_original>
// kernel: tpu_custom_call.1
$region0: #{tpu_custom_call.1}
  #allocation0 [shape = 'u32[]', space=smem, size = 0x4, offset = 0x4, fixed_abs, tag = 'smem constant byte address 0x4 - core index']
  #allocation1 [shape = 'u32[144,128]{1,0:T(1,128)}', space=vmem, size = 0x12000, scoped, tag = 'internal scratch']
  %s0 = inlined_call_operand.hbm [shape: f32[2,32], index: 0, kind: input, shape index: {}]
  %s1 = inlined_call_operand.hbm [shape: bf16[32,128], index: 1, kind: input, shape index: {}]
  %s2 = inlined_call_operand.hbm [shape: f32[2,128], index: 2, kind: output, shape index: {}]
  %s3 = sld [smem:[#allocation0]]
  $region26: #{tpu_custom_call.1} parent=0
    _
  %s5 = ssub.s32 1, %s3
  %s6 = scalar_select 0, %s5, %s3
  $region1: #{tpu_custom_call.1} parent=0
    #allocation2 [shape = 'u8[1024]{0}', space=vmem, size = 0x400, scoped, tag = 'input window, operand 0, single buffered']
    #allocation3 [shape = 's32[1]{0}', space=sflag, size = 0x4, scoped, tag = 'scoped memory for tpu_custom_call.1']
    #allocation4 [shape = 's32[1]{0}', space=sflag, size = 0x4, scoped, tag = 'scoped memory for tpu_custom_call.1']
    #allocation5 [shape = 'u8[8192]{0}', space=vmem, size = 0x2000, scoped, tag = 'input window, operand 1, single buffered']
    #allocation6 [shape = 's32[1]{0}', space=sflag, size = 0x4, scoped, tag = 'scoped memory for tpu_custom_call.1']
    #allocation7 [shape = 'u8[1024]{0}', space=vmem, size = 0x400, scoped, tag = 'output window, operand 0, single buffered']
    %7 = vsyncpa [#allocation3], 0
    %8 = vsyncpa [#allocation6], 0
    %9 = vsyncpa [#allocation4], 0
    // Predicated region
    $region2: #{tpu_custom_call.1} parent=1 // pred_check
      _
    $region3: #{tpu_custom_call.1} parent=1 // pred_check_branch
      %11 = sbr.rel (0) target = $region5
    $region4: #{tpu_custom_call.1} parent=1 // pred_region
      %s13 = ssub.s32 32, 32
      %14 = vsyncadd [#allocation3], %s13
      %s16 = sshll.u32 [#allocation2], 4
      %s17 = int_to_ptr.vmem [resolvable:$true] %s16
      %19 = dma.hbm_to_vmem [thread:$0]  %s0, 32, %s17, [#allocation3]
    $region5: #{tpu_custom_call.1} parent=1 // pred_fallthru
      _
    // Predicated region
    $region6: #{tpu_custom_call.1} parent=1 // pred_check
      _
    $region7: #{tpu_custom_call.1} parent=1 // pred_check_branch
      %21 = sbr.rel (0) target = $region9
    $region8: #{tpu_custom_call.1} parent=1 // pred_region
      %s23 = ssub.s32 256, 256
      %24 = vsyncadd [#allocation6], %s23
      %s25 = sshll.u32 [#allocation5], 4
      %s26 = int_to_ptr.vmem [resolvable:$true] %s25
      %31 = dma.hbm_to_vmem [thread:$0]  %s1, 256, %s26, [#allocation6], 64, 64, 4
    $region9: #{tpu_custom_call.1} parent=1 // pred_fallthru
      _
    // Predicated region
    $region10: #{tpu_custom_call.1} parent=1 // pred_check
      _
    $region11: #{tpu_custom_call.1} parent=1 // pred_check_branch
      %33 = sbr.rel (0) target = $region13
    $region12: #{tpu_custom_call.1} parent=1 // pred_region
      %34 = dma.done [#allocation3], 32
    $region13: #{tpu_custom_call.1} parent=1 // pred_fallthru
      _
    // Predicated region
    $region14: #{tpu_custom_call.1} parent=1 // pred_check
      _
    $region15: #{tpu_custom_call.1} parent=1 // pred_check_branch
      %36 = sbr.rel (0) target = $region17
    $region16: #{tpu_custom_call.1} parent=1 // pred_region
      %37 = dma.done [#allocation6], 256
    $region17: #{tpu_custom_call.1} parent=1 // pred_fallthru
      _
    %v39 = vld [vmem:[#allocation2] sm:$0x3]
    %v40 = vmul.f32 %v39, 16.0
    %v41 = vsub.f32 %v40, 0.5
    %v42 = vround.ne.pseudo %v41
    %v43 = vpack.c.bf16 %v42, %v42
    %v44 = vld [vmem:[#allocation5] sm:$0xf]
    %v45 = vld [vmem:[#allocation5 + $0x4] sm:$0xf]
    %v46 = vld [vmem:[#allocation5 + $0x8] sm:$0xf]
    %v47 = vld [vmem:[#allocation5 + $0xc] sm:$0xf]
    %v52 = vunpack.c.l.b16 %v44
    %v53 = vunpack.c.l.b16 %v45
    %v54 = vunpack.c.l.b16 %v46
    %v55 = vunpack.c.l.b16 %v47
    %v56 = vpack.c.b16 %v53, %v52
    %v57 = vpack.c.b16 %v55, %v54
    %vm60 = vcmask 261120
    %v62 = vsel %vm60, %v43, 0
    %64 = vmatprep.subr.bf16.mxu0 0
    %65 = vmatpush1.bf16.msra.mxu0 %v56
    %66 = vmatprep.subr.bf16.mxu0 0
    %67 = vmatpush1.bf16.msra.mxu0 %v57
    %68 = vmatprep.subr.bf16.mxu0 0
    %69 = vmatpush1.bf16.msra.mxu0 0
    %70 = vmatprep.subr.bf16.mxu0 0
    %71 = vmatpush1.bf16.msra.mxu0 0
    %72 = vmatprep.subr.bf16.mxu0 0
    %73 = vmatpush1.bf16.msra.mxu0 0
    %74 = vmatprep.subr.bf16.mxu0 0
    %75 = vmatpush1.bf16.msra.mxu0 0
    %76 = vmatprep.subr.bf16.mxu0 0
    %77 = vmatpush1.bf16.msra.mxu0 0
    %78 = vmatprep.subr.bf16.mxu0 0
    %79 = vmatpush1.bf16.msra.mxu0 0
    %80 = vmatprep.subr.bf16.mxu0 0
    %81 = vmatpush1.bf16.msra.mxu0 0
    %82 = vmatprep.subr.bf16.mxu0 0
    %83 = vmatpush1.bf16.msra.mxu0 0
    %84 = vmatprep.subr.bf16.mxu0 0
    %85 = vmatpush1.bf16.msra.mxu0 0
    %86 = vmatprep.subr.bf16.mxu0 0
    %87 = vmatpush1.bf16.msra.mxu0 0
    %88 = vmatprep.subr.bf16.mxu0 0
    %89 = vmatpush1.bf16.msra.mxu0 0
    %90 = vmatprep.subr.bf16.mxu0 0
    %91 = vmatpush1.bf16.msra.mxu0 0
    %92 = vmatprep.subr.bf16.mxu0 0
    %93 = vmatpush1.bf16.msra.mxu0 0
    %94 = vmatprep.subr.bf16.mxu0 0
    %95 = vmatpush1.bf16.msra.mxu0 0
    %96 = vmatprep.mubr.bf16.mxu0 0
    %97 = vmatmul.mubr.bf16.gmra.mrb[0].mxu0 %v62
    %v98 = vpop.f32.mrb[0].mxu0
    %v99 = vadd.f32 0.0, %v98
    %v100 = vpop.f32.mrb[0].mxu0
    %v101 = vpop.f32.mrb[0].mxu0
    %v102 = vpop.f32.mrb[0].mxu0
    %103 = vdwg.mxu0
    %v104 = vfloor.f32 %v99
    %v105 = vcvt.f32.s32.to.zero.pseudo %v104
    %v106 = vand.u32 %v105, 1
    %v107 = vcvt.s32.f32 %v106
    %108 = vst [vmem:[#allocation7] sm:$0x3] %v107
    // Predicated region
    $region18: #{tpu_custom_call.1} parent=1 // pred_check
      _
    $region19: #{tpu_custom_call.1} parent=1 // pred_check_branch
      %110 = sbr.rel (0) target = $region21
    $region20: #{tpu_custom_call.1} parent=1 // pred_region
      %s112 = ssub.s32 32, 32
      %113 = vsyncadd [#allocation4], %s112
      %s115 = sshll.u32 [#allocation7], 4
      %s116 = int_to_ptr.vmem [resolvable:$true] %s115
      %118 = dma.vmem_to_hbm [thread:$0]  %s116, 32, %s2, [#allocation4]
    $region21: #{tpu_custom_call.1} parent=1 // pred_fallthru
      _
    // Predicated region
    $region22: #{tpu_custom_call.1} parent=1 // pred_check
      _
    $region23: #{tpu_custom_call.1} parent=1 // pred_check_branch
      %120 = sbr.rel (0) target = $region25
    $region24: #{tpu_custom_call.1} parent=1 // pred_region
      %121 = dma.done [#allocation4], 32
    $region25: #{tpu_custom_call.1} parent=1 // pred_fallthru
      _
    %122 = vsyncpa [#allocation3], 1
    %123 = vsyncpa [#allocation6], 1
    %124 = vsyncpa [#allocation4], 1

</llo_original>
